<compile_context>
chip_gen: v5e
topology: v5e:2x2
jax: 0.10.0
libtpu: 0.0.40
codegen_flags: <defaults>
</compile_context>

<pallas_src>
import jax
import jax.numpy as jnp
import numpy as np
from jax.experimental import pallas as pl
from jax.experimental.pallas import tpu as pltpu  # noqa: F401  (kept for clarity)

# ---------------------------------------------------------------------------
# Model hyper-parameters (from the PyTorch module). The hard-coded 94 in
# ChannelAttention forces the pooled length to be 94, which fixes the input
# sequence length (smallest consistent choice: L = 1496).
# ---------------------------------------------------------------------------
IN_CHANNELS = 2
OUT_CHANNELS = 4
KSIZE = 16
PAD = 6
STRIDE = 4
POOL_K, POOL_S = 2, 4
L_POOL = 94                                       # ChannelAttention fc maps to 94
L_CONV = (L_POOL - 1) * POOL_S + POOL_K           # 374
L_IN = (L_CONV - 1) * STRIDE + KSIZE - 2 * PAD    # 1496
BATCH = 2
C4 = 4 * OUT_CHANNELS                             # channels after concat of the 4 convs
CK = IN_CHANNELS * KSIZE                          # im2col patch width
HID = 16                                          # ChannelAttention hidden size
LP_PAD = 128                                      # L_POOL padded to one full lane tile


# ---------------------------------------------------------------------------
# Pallas kernel: one fused conv(matmul) + maxpool + channel-attention + gate.
# ---------------------------------------------------------------------------
def msconv_kernel(p_ref, w_ref, b_ref, w1_ref, w2_ref, o_ref):
    # p_ref : (CK, 2*N*LP_PAD)  im2col patches, columns ordered (tap, batch, pos)
    # w_ref : (C4, CK)          stacked conv1..conv4 weights
    # b_ref : (C4, 1)           stacked conv biases
    # w1_ref: (1, HID)          ChannelAttention fc1 weight (transposed)
    # w2_ref: (LP_PAD, HID)     ChannelAttention fc2 weight (rows >= 94 zero-padded)
    # o_ref : (C4, N*LP_PAD)    lane-dense output slab, columns ordered (batch, pos)
    half = o_ref.shape[1]                 # N * LP_PAD
    n_batch = half // LP_PAD

    # All 4 conv branches x 2 pool taps x N batch elements in one MXU matmul.
    conv = jnp.dot(w_ref[...], p_ref[...],
                   preferred_element_type=jnp.float32)            # (C4, 2*half)

    # MaxPool1d(2, stride=4): max over the two taps, then add the conv bias
    # (max(a+b, c+b) == max(a, c) + b, so adding bias after the max is exact).
    pooled = jnp.maximum(conv[:, :half], conv[:, half:]) + b_ref[...]   # (C4, half)

    w1 = w1_ref[...]                                               # (1, HID)
    w2 = w2_ref[...]                                               # (LP_PAD, HID)

    # Batch is small & static -> unrolled Python loop over 128-aligned blocks.
    for b in range(n_batch):
        blk = pooled[:, b * LP_PAD:(b + 1) * LP_PAD]               # (C4, 128)
        # ChannelAttention: AdaptiveAvgPool1d(1) -> Linear(1,16) -> ReLU
        #                   -> Linear(16,94) -> Sigmoid
        s = jnp.sum(blk[:, :L_POOL], axis=1, keepdims=True) * (1.0 / L_POOL)
        h = jnp.maximum(s * w1, 0.0)                               # (C4, HID)
        logits = jax.lax.dot_general(h, w2, (((1,), (1,)), ((), ())),
                                     preferred_element_type=jnp.float32)  # (C4, 128)
        att = jax.nn.sigmoid(logits)
        o_ref[:, b * LP_PAD:(b + 1) * LP_PAD] = (blk * att).astype(o_ref.dtype)


def multi_scale_conv_layer(x, w_all, b_all, w1, w2):
    """x: (N, C_in, 1496) float32 -> (N, 4*C_out, 94) float32 (PyTorch NCL)."""
    n = x.shape[0]
    if x.shape[1:] != (IN_CHANNELS, L_IN):
        raise ValueError(
            f"expected input shape (N, {IN_CHANNELS}, {L_IN}), got {x.shape}")

    # ---- glue: zero-pad + im2col via contiguous slices (no gather) ----------
    # Conv position j reads x_pad[..., 4*j : 4*j+16]; the pool keeps j = 4*p + t
    # (t in {0,1}), so per tap the start offsets step by exactly KSIZE=16 and a
    # plain slice + reshape produces the patches.
    x_pad = jnp.pad(x, ((0, 0), (0, 0), (PAD, PAD)))               # (N, Cin, 1508)
    taps = []
    for t in range(POOL_K):
        xt = x_pad[:, :, STRIDE * t: STRIDE * t + KSIZE * L_POOL]  # (N, Cin, 1504)
        xt = xt.reshape(n, IN_CHANNELS, L_POOL, KSIZE)             # (N, Cin, 94, 16)
        xt = jnp.transpose(xt, (0, 2, 1, 3)).reshape(n, L_POOL, CK)  # (N, 94, 32)
        xt = jnp.pad(xt, ((0, 0), (0, LP_PAD - L_POOL), (0, 0)))   # (N, 128, 32)
        taps.append(xt)
    p = jnp.stack(taps, axis=0).reshape(POOL_K * n * LP_PAD, CK)   # (2*N*128, 32)
    p = p.T                                                        # (32, 2*N*128)

    w_r = w_all.reshape(C4, CK)                                    # (C4, CK)
    b_r = b_all.reshape(C4, 1)                                     # (C4, 1)
    w2_pad = jnp.pad(w2, ((0, LP_PAD - L_POOL), (0, 0)))           # (128, HID)

    # Single invocation, whole arrays as VMEM blocks (total working set < 0.5 MiB).
    # NOTE: if the batch ever grows large, reintroduce a "parallel" batch grid
    # axis so v7x's second TensorCore can take half; at N=2 it is pure overhead.
    out_slab = pl.pallas_call(
        msconv_kernel,
        out_shape=jax.ShapeDtypeStruct((C4, n * LP_PAD), jnp.float32),
    )(p, w_r, b_r, w1, w2_pad)

    # Lane-dense slab -> PyTorch (N, 4*C_out, 94) layout.
    out = out_slab.reshape(C4, n, LP_PAD)[:, :, :L_POOL]
    return jnp.transpose(out, (1, 0, 2))


# ---------------------------------------------------------------------------
# Pure-JAX reference (mirrors the PyTorch forward) for correctness checking.
# ---------------------------------------------------------------------------
def reference(x, w_all, b_all, w1, w2):
    outs = []
    for i in range(4):
        w_i = w_all[i]                                             # (Cout, Cin, K)
        b_i = b_all[i * OUT_CHANNELS:(i + 1) * OUT_CHANNELS]
        y = jax.lax.conv_general_dilated(
            x, w_i, window_strides=(STRIDE,), padding=[(PAD, PAD)],
            dimension_numbers=("NCH", "OIH", "NCH"))
        y = y + b_i[None, :, None]
        y = jax.lax.reduce_window(y, -jnp.inf, jax.lax.max,
                                  (1, 1, POOL_K), (1, 1, POOL_S), "VALID")
        s = jnp.mean(y, axis=2, keepdims=True)                     # (N, C, 1)
        h = jnp.maximum(jnp.matmul(s, w1), 0.0)                    # (N, C, 16)
        att = jax.nn.sigmoid(jnp.matmul(h, w2.T))                  # (N, C, 94)
        outs.append(y * att)
    return jnp.concatenate(outs, axis=1)


if __name__ == "__main__":
    key = jax.random.PRNGKey(0)
    k_x, k_w, k_b, k_w1, k_w2 = jax.random.split(key, 5)

    # Deterministic synthetic parameters (shapes from the module __init__).
    x = jax.random.normal(k_x, (BATCH, IN_CHANNELS, L_IN), dtype=jnp.float32)
    fan_in = IN_CHANNELS * KSIZE
    bound = 1.0 / np.sqrt(fan_in)
    w_all = jax.random.uniform(k_w, (4, OUT_CHANNELS, IN_CHANNELS, KSIZE),
                               minval=-bound, maxval=bound, dtype=jnp.float32)
    b_all = jax.random.uniform(k_b, (4 * OUT_CHANNELS,),
                               minval=-bound, maxval=bound, dtype=jnp.float32)
    # ChannelAttention weights (shared across the 4 branches, no bias):
    # fc1: Linear(1, 16)  -> stored transposed as (1, 16)
    # fc2: Linear(16, 94) -> stored as PyTorch weight (94, 16)
    w1 = jax.random.uniform(k_w1, (1, HID), minval=-1.0, maxval=1.0,
                            dtype=jnp.float32)
    w2 = jax.random.uniform(k_w2, (L_POOL, HID),
                            minval=-1.0 / np.sqrt(HID), maxval=1.0 / np.sqrt(HID),
                            dtype=jnp.float32)

    out = jax.block_until_ready(
        jax.jit(multi_scale_conv_layer)(x, w_all, b_all, w1, w2))
    ref = jax.block_until_ready(reference(x, w_all, b_all, w1, w2))
    np.testing.assert_allclose(np.asarray(out), np.asarray(ref),
                               rtol=1e-4, atol=1e-4)
    print("KERNEL_OK")
</pallas_src>

<mosaic_0001>
module attributes {stable_mosaic.version = 11 : i64} {
  func.func @msconv_kernel(%arg0: memref<32x512xf32, #tpu.memory_space<vmem>>, %arg1: memref<16x32xf32, #tpu.memory_space<vmem>>, %arg2: memref<16x1xf32, #tpu.memory_space<vmem>>, %arg3: memref<1x16xf32, #tpu.memory_space<vmem>>, %arg4: memref<128x16xf32, #tpu.memory_space<vmem>>, %arg5: memref<16x256xf32, #tpu.memory_space<vmem>>) attributes {dimension_semantics = [], scalar_prefetch = 0 : i64, scratch_operands = 0 : i64, tpu.core_type = #tpu.core_type<tc>} {
    %c0 = arith.constant 0 : index
    %c0_0 = arith.constant 0 : index
    %0 = vector.load %arg1[%c0, %c0_0] : memref<16x32xf32, #tpu.memory_space<vmem>>, vector<16x32xf32>
    %c0_1 = arith.constant 0 : index
    %c0_2 = arith.constant 0 : index
    %1 = vector.load %arg0[%c0_1, %c0_2] : memref<32x512xf32, #tpu.memory_space<vmem>>, vector<32x512xf32>
    %cst = arith.constant dense<0.000000e+00> : vector<16x512xf32>
    %2 = tpu.matmul %0, %1, %cst {dimension_numbers = #tpu.dot_dimension_numbers<[1], [0], [0], [1], [0, 0, 1, 1], [], []>} : vector<16x32xf32>, vector<32x512xf32>, vector<16x512xf32> -> vector<16x512xf32>
    %3 = vector.extract_strided_slice %2 {offsets = [0, 0], sizes = [16, 256], strides = [1, 1]} : vector<16x512xf32> to vector<16x256xf32>
    %4 = vector.extract_strided_slice %2 {offsets = [0, 256], sizes = [16, 256], strides = [1, 1]} : vector<16x512xf32> to vector<16x256xf32>
    %5 = arith.maximumf %3, %4 : vector<16x256xf32>
    %c0_3 = arith.constant 0 : index
    %c0_4 = arith.constant 0 : index
    %6 = vector.load %arg2[%c0_3, %c0_4] : memref<16x1xf32, #tpu.memory_space<vmem>>, vector<16x1xf32>
    %7 = vector.broadcast %6 : vector<16x1xf32> to vector<16x256xf32>
    %8 = arith.addf %5, %7 : vector<16x256xf32>
    %c0_5 = arith.constant 0 : index
    %c0_6 = arith.constant 0 : index
    %9 = vector.load %arg3[%c0_5, %c0_6] : memref<1x16xf32, #tpu.memory_space<vmem>>, vector<1x16xf32>
    %c0_7 = arith.constant 0 : index
    %c0_8 = arith.constant 0 : index
    %10 = vector.load %arg4[%c0_7, %c0_8] : memref<128x16xf32, #tpu.memory_space<vmem>>, vector<128x16xf32>
    %11 = vector.extract_strided_slice %8 {offsets = [0, 0], sizes = [16, 128], strides = [1, 1]} : vector<16x256xf32> to vector<16x128xf32>
    %12 = vector.extract_strided_slice %11 {offsets = [0, 0], sizes = [16, 94], strides = [1, 1]} : vector<16x128xf32> to vector<16x94xf32>
    %cst_9 = arith.constant dense<0.000000e+00> : vector<16xf32>
    %13 = vector.multi_reduction <add>, %12, %cst_9 [1] : vector<16x94xf32> to vector<16xf32>
    %14 = vector.shape_cast %13 : vector<16xf32> to vector<16x1xf32>
    %cst_10 = arith.constant 0.0106382975 : f32
    %15 = vector.broadcast %cst_10 : f32 to vector<16x1xf32>
    %16 = arith.mulf %14, %15 : vector<16x1xf32>
    %17 = vector.broadcast %16 : vector<16x1xf32> to vector<16x16xf32>
    %18 = vector.broadcast %9 : vector<1x16xf32> to vector<16x16xf32>
    %19 = arith.mulf %17, %18 : vector<16x16xf32>
    %cst_11 = arith.constant 0.000000e+00 : f32
    %20 = vector.broadcast %cst_11 : f32 to vector<16x16xf32>
    %21 = arith.maximumf %19, %20 : vector<16x16xf32>
    %cst_12 = arith.constant dense<0.000000e+00> : vector<16x128xf32>
    %22 = tpu.matmul %21, %10, %cst_12 {dimension_numbers = #tpu.dot_dimension_numbers<[1], [1], [0], [0], [0, 0, 1, 0], [], []>} : vector<16x16xf32>, vector<128x16xf32>, vector<16x128xf32> -> vector<16x128xf32>
    %23 = arith.negf %22 : vector<16x128xf32>
    %24 = math.exp %23 : vector<16x128xf32>
    %cst_13 = arith.constant 1.000000e+00 : f32
    %25 = vector.broadcast %cst_13 : f32 to vector<16x128xf32>
    %26 = arith.addf %25, %24 : vector<16x128xf32>
    %27 = arith.divf %25, %26 : vector<16x128xf32>
    %28 = arith.mulf %11, %27 : vector<16x128xf32>
    %c0_14 = arith.constant 0 : index
    %c0_15 = arith.constant 0 : index
    %29 = vector.load %arg5[%c0_14, %c0_15] : memref<16x256xf32, #tpu.memory_space<vmem>>, vector<16x128xf32>
    tpu.vector_store %arg5[%c0_14, %c0_15], %28 {strides = array<i32>} : memref<16x256xf32, #tpu.memory_space<vmem>>, vector<16x128xf32>,
    %30 = vector.extract_strided_slice %8 {offsets = [0, 128], sizes = [16, 128], strides = [1, 1]} : vector<16x256xf32> to vector<16x128xf32>
    %31 = vector.extract_strided_slice %30 {offsets = [0, 0], sizes = [16, 94], strides = [1, 1]} : vector<16x128xf32> to vector<16x94xf32>
    %cst_16 = arith.constant dense<0.000000e+00> : vector<16xf32>
    %32 = vector.multi_reduction <add>, %31, %cst_16 [1] : vector<16x94xf32> to vector<16xf32>
    %33 = vector.shape_cast %32 : vector<16xf32> to vector<16x1xf32>
    %cst_17 = arith.constant 0.0106382975 : f32
    %34 = vector.broadcast %cst_17 : f32 to vector<16x1xf32>
    %35 = arith.mulf %33, %34 : vector<16x1xf32>
    %36 = vector.broadcast %35 : vector<16x1xf32> to vector<16x16xf32>
    %37 = vector.broadcast %9 : vector<1x16xf32> to vector<16x16xf32>
    %38 = arith.mulf %36, %37 : vector<16x16xf32>
    %cst_18 = arith.constant 0.000000e+00 : f32
    %39 = vector.broadcast %cst_18 : f32 to vector<16x16xf32>
    %40 = arith.maximumf %38, %39 : vector<16x16xf32>
    %cst_19 = arith.constant dense<0.000000e+00> : vector<16x128xf32>
    %41 = tpu.matmul %40, %10, %cst_19 {dimension_numbers = #tpu.dot_dimension_numbers<[1], [1], [0], [0], [0, 0, 1, 0], [], []>} : vector<16x16xf32>, vector<128x16xf32>, vector<16x128xf32> -> vector<16x128xf32>
    %42 = arith.negf %41 : vector<16x128xf32>
    %43 = math.exp %42 : vector<16x128xf32>
    %cst_20 = arith.constant 1.000000e+00 : f32
    %44 = vector.broadcast %cst_20 : f32 to vector<16x128xf32>
    %45 = arith.addf %44, %43 : vector<16x128xf32>
    %46 = arith.divf %44, %45 : vector<16x128xf32>
    %47 = arith.mulf %30, %46 : vector<16x128xf32>
    %c0_21 = arith.constant 0 : index
    %c128 = arith.constant 128 : index
    %48 = vector.load %arg5[%c0_21, %c128] : memref<16x256xf32, #tpu.memory_space<vmem>>, vector<16x128xf32>
    tpu.vector_store %arg5[%c0_21, %c128], %47 {strides = array<i32>} : memref<16x256xf32, #tpu.memory_space<vmem>>, vector<16x128xf32>,
    return
  }
}

</mosaic_0001>

<llo_original>
// kernel: multi_scale_conv_layer.1
$region0: #{multi_scale_conv_layer.1}
  #allocation0 [shape = 'u32[]', space=smem, size = 0x4, offset = 0x4, fixed_abs, tag = 'smem constant byte address 0x4 - core index']
  #allocation1 [shape = 'u32[72,128]{1,0:T(1,128)}', space=vmem, size = 0x9000, scoped, tag = 'internal scratch']
  %s0 = inlined_call_operand.vmem [shape: f32[32,512], index: 0, kind: input, shape index: {}]
  %s1 = inlined_call_operand.vmem [shape: f32[16,32], index: 1, kind: input, shape index: {}]
  %s2 = inlined_call_operand.vmem [shape: f32[16,1], index: 2, kind: input, shape index: {}]
  %s3 = inlined_call_operand.vmem [shape: f32[1,16], index: 3, kind: input, shape index: {}]
  %s4 = inlined_call_operand.vmem [shape: f32[128,16], index: 4, kind: input, shape index: {}]
  %s5 = inlined_call_operand.vmem [shape: f32[16,256], index: 5, kind: output, shape index: {}]
  %s6 = sld [smem:[#allocation0]]
  $region30: #{multi_scale_conv_layer.1} parent=0
    _
  %s8 = ssub.s32 1, %s6
  %s9 = scalar_select 0, %s8, %s6
  // Predicated region
  $region2: #{multi_scale_conv_layer.1} parent=0 // pred_check
    _
  $region3: #{multi_scale_conv_layer.1} parent=0 // pred_check_branch
    %11 = sbr.rel (0) target = $region5
  $region4: #{multi_scale_conv_layer.1} parent=0 // pred_region
    _
  $region5: #{multi_scale_conv_layer.1} parent=0 // pred_fallthru
    _
  // Predicated region
  $region6: #{multi_scale_conv_layer.1} parent=0 // pred_check
    _
  $region7: #{multi_scale_conv_layer.1} parent=0 // pred_check_branch
    %13 = sbr.rel (0) target = $region9
  $region8: #{multi_scale_conv_layer.1} parent=0 // pred_region
    _
  $region9: #{multi_scale_conv_layer.1} parent=0 // pred_fallthru
    _
  // Predicated region
  $region10: #{multi_scale_conv_layer.1} parent=0 // pred_check
    _
  $region11: #{multi_scale_conv_layer.1} parent=0 // pred_check_branch
    %15 = sbr.rel (0) target = $region13
  $region12: #{multi_scale_conv_layer.1} parent=0 // pred_region
    _
  $region13: #{multi_scale_conv_layer.1} parent=0 // pred_fallthru
    _
  // Predicated region
  $region14: #{multi_scale_conv_layer.1} parent=0 // pred_check
    _
  $region15: #{multi_scale_conv_layer.1} parent=0 // pred_check_branch
    %17 = sbr.rel (0) target = $region17
  $region16: #{multi_scale_conv_layer.1} parent=0 // pred_region
    _
  $region17: #{multi_scale_conv_layer.1} parent=0 // pred_fallthru
    _
  // Predicated region
  $region18: #{multi_scale_conv_layer.1} parent=0 // pred_check
    _
  $region19: #{multi_scale_conv_layer.1} parent=0 // pred_check_branch
    %19 = sbr.rel (0) target = $region21
  $region20: #{multi_scale_conv_layer.1} parent=0 // pred_region
    _
  $region21: #{multi_scale_conv_layer.1} parent=0 // pred_fallthru
    _
  %v20 = vld [vmem:[%s1] sm:$0xff]
  %v21 = vld [vmem:[%s1 + $0x8] sm:$0xff]
  %v22 = vld [vmem:[%s0] sm:$0xff]
  %v23 = vld [vmem:[%s0 + $0x8] sm:$0xff]
  %v24 = vld [vmem:[%s0 + $0x10] sm:$0xff]
  %v25 = vld [vmem:[%s0 + $0x18] sm:$0xff]
  %v26 = vld [vmem:[%s0 + $0x20] sm:$0xff]
  %v27 = vld [vmem:[%s0 + $0x28] sm:$0xff]
  %v28 = vld [vmem:[%s0 + $0x30] sm:$0xff]
  %v29 = vld [vmem:[%s0 + $0x38] sm:$0xff]
  %v30 = vld [vmem:[%s0 + $0x40] sm:$0xff]
  %v31 = vld [vmem:[%s0 + $0x48] sm:$0xff]
  %v32 = vld [vmem:[%s0 + $0x50] sm:$0xff]
  %v33 = vld [vmem:[%s0 + $0x58] sm:$0xff]
  %v34 = vld [vmem:[%s0 + $0x60] sm:$0xff]
  %v35 = vld [vmem:[%s0 + $0x68] sm:$0xff]
  %v36 = vld [vmem:[%s0 + $0x70] sm:$0xff]
  %v37 = vld [vmem:[%s0 + $0x78] sm:$0xff]
  %vm38 = vcmask 261120
  %v40 = vsel %vm38, %v20, 0
  %v43 = vsel %vm38, %v21, 0
  %45 = vmatpush.msra.mxu0 0.0
  %46 = vmatpush.msra.mxu0 0.0
  %47 = vmatpush.msra.mxu0 0.0
  %48 = vmatpush.msra.mxu0 0.0
  %49 = vmatpush.msra.mxu0 0.0
  %50 = vmatpush.msra.mxu0 0.0
  %51 = vmatpush.msra.mxu0 0.0
  %52 = vmatpush.msra.mxu0 0.0
  %53 = vmatpush.msra.mxu0 0.0
  %54 = vmatpush.msra.mxu0 0.0
  %55 = vmatpush.msra.mxu0 0.0
  %56 = vmatpush.msra.mxu0 0.0
  %57 = vmatpush.msra.mxu0 %v34
  %58 = vmatpush.msra.mxu0 %v30
  %59 = vmatpush.msra.mxu0 %v26
  %60 = vmatpush.msra.mxu0 %v22
  %61 = vmatmul.f32.gmra.mxu0 %v40
  %v62 = vpop.f32.mrf.mxu0
  %v63 = vadd.f32 0.0, %v62
  %64 = vmatmul.f32.gmra.mxu0 %v43
  %v65 = vpop.f32.mrf.mxu0
  %v66 = vadd.f32 0.0, %v65
  %67 = vdwg.mxu0
  %68 = vmatpush.msra.mxu0 0.0
  %69 = vmatpush.msra.mxu0 0.0
  %70 = vmatpush.msra.mxu0 0.0
  %71 = vmatpush.msra.mxu0 0.0
  %72 = vmatpush.msra.mxu0 0.0
  %73 = vmatpush.msra.mxu0 0.0
  %74 = vmatpush.msra.mxu0 0.0
  %75 = vmatpush.msra.mxu0 0.0
  %76 = vmatpush.msra.mxu0 0.0
  %77 = vmatpush.msra.mxu0 0.0
  %78 = vmatpush.msra.mxu0 0.0
  %79 = vmatpush.msra.mxu0 0.0
  %80 = vmatpush.msra.mxu0 %v35
  %81 = vmatpush.msra.mxu0 %v31
  %82 = vmatpush.msra.mxu0 %v27
  %83 = vmatpush.msra.mxu0 %v23
  %84 = vmatmul.f32.gmra.mxu0 %v40
  %v85 = vpop.f32.mrf.mxu0
  %v86 = vadd.f32 0.0, %v85
  %87 = vmatmul.f32.gmra.mxu0 %v43
  %v88 = vpop.f32.mrf.mxu0
  %v89 = vadd.f32 0.0, %v88
  %90 = vdwg.mxu0
  %91 = vmatpush.msra.mxu0 0.0
  %92 = vmatpush.msra.mxu0 0.0
  %93 = vmatpush.msra.mxu0 0.0
  %94 = vmatpush.msra.mxu0 0.0
  %95 = vmatpush.msra.mxu0 0.0
  %96 = vmatpush.msra.mxu0 0.0
  %97 = vmatpush.msra.mxu0 0.0
  %98 = vmatpush.msra.mxu0 0.0
  %99 = vmatpush.msra.mxu0 0.0
  %100 = vmatpush.msra.mxu0 0.0
  %101 = vmatpush.msra.mxu0 0.0
  %102 = vmatpush.msra.mxu0 0.0
  %103 = vmatpush.msra.mxu0 %v36
  %104 = vmatpush.msra.mxu0 %v32
  %105 = vmatpush.msra.mxu0 %v28
  %106 = vmatpush.msra.mxu0 %v24
  %107 = vmatmul.f32.gmra.mxu0 %v40
  %v108 = vpop.f32.mrf.mxu0
  %v109 = vadd.f32 0.0, %v108
  %110 = vmatmul.f32.gmra.mxu0 %v43
  %v111 = vpop.f32.mrf.mxu0
  %v112 = vadd.f32 0.0, %v111
  %113 = vdwg.mxu0
  %114 = vmatpush.msra.mxu0 0.0
  %115 = vmatpush.msra.mxu0 0.0
  %116 = vmatpush.msra.mxu0 0.0
  %117 = vmatpush.msra.mxu0 0.0
  %118 = vmatpush.msra.mxu0 0.0
  %119 = vmatpush.msra.mxu0 0.0
  %120 = vmatpush.msra.mxu0 0.0
  %121 = vmatpush.msra.mxu0 0.0
  %122 = vmatpush.msra.mxu0 0.0
  %123 = vmatpush.msra.mxu0 0.0
  %124 = vmatpush.msra.mxu0 0.0
  %125 = vmatpush.msra.mxu0 0.0
  %126 = vmatpush.msra.mxu0 %v37
  %127 = vmatpush.msra.mxu0 %v33
  %128 = vmatpush.msra.mxu0 %v29
  %129 = vmatpush.msra.mxu0 %v25
  %130 = vmatmul.f32.gmra.mxu0 %v40
  %v131 = vpop.f32.mrf.mxu0
  %v132 = vadd.f32 0.0, %v131
  %133 = vmatmul.f32.gmra.mxu0 %v43
  %v134 = vpop.f32.mrf.mxu0
  %v135 = vadd.f32 0.0, %v134
  %136 = vdwg.mxu0
  %v137 = vmax.f32 %v63, %v109
  %v138 = vmax.f32 %v86, %v132
  %v139 = vmax.f32 %v66, %v112
  %v140 = vmax.f32 %v89, %v135
  %v141 = vld [vmem:[%s2] sm:$0xff]
  %v142 = vld [vmem:[%s2 + $0x8] sm:$0xff]
  %144 = vset.pattern.permute.xlu0 0
  %145 = vperm.xlu0 %144, %v141
  %v146 = vpop.permute.xlu0 %145
  %149 = vset.pattern.permute.xlu0 0
  %150 = vperm.xlu0 %149, %v142
  %v151 = vpop.permute.xlu0 %150
  %v153 = vadd.f32 %v137, %v146
  %v154 = vadd.f32 %v138, %v146
  %v155 = vadd.f32 %v139, %v151
  %v156 = vadd.f32 %v140, %v151
  %v157 = vld [vmem:[%s3] sm:$0x1]
  %v158 = vld [vmem:[%s4] sm:$0xff]
  %v159 = vld [vmem:[%s4 + $0x8] sm:$0xff]
  %v160 = vld [vmem:[%s4 + $0x10] sm:$0xff]
  %v161 = vld [vmem:[%s4 + $0x18] sm:$0xff]
  %v162 = vld [vmem:[%s4 + $0x20] sm:$0xff]
  %v163 = vld [vmem:[%s4 + $0x28] sm:$0xff]
  %v164 = vld [vmem:[%s4 + $0x30] sm:$0xff]
  %v165 = vld [vmem:[%s4 + $0x38] sm:$0xff]
  %v166 = vld [vmem:[%s4 + $0x40] sm:$0xff]
  %v167 = vld [vmem:[%s4 + $0x48] sm:$0xff]
  %v168 = vld [vmem:[%s4 + $0x50] sm:$0xff]
  %v169 = vld [vmem:[%s4 + $0x58] sm:$0xff]
  %v170 = vld [vmem:[%s4 + $0x60] sm:$0xff]
  %v171 = vld [vmem:[%s4 + $0x68] sm:$0xff]
  %v172 = vld [vmem:[%s4 + $0x70] sm:$0xff]
  %v173 = vld [vmem:[%s4 + $0x78] sm:$0xff]
  %vm174 = vcmask 769024
  %v175 = vsel %vm174, %v153, 0.0
  %176 = vadd.xlane.f32.xlu0 %v175
  %v177 = vpop.xlane.xlu0 %176
  %v178 = vsel %vm174, %v155, 0.0
  %179 = vadd.xlane.f32.xlu0 %v178
  %v180 = vpop.xlane.xlu0 %179
  %v181 = vmul.f32 %v177, 0.010638298
  %v182 = vmul.f32 %v180, 0.010638298
  %v184 = vperm.slane %v157, 0
  %v186 = vmul.f32 %v181, %v184
  %v187 = vmul.f32 %v182, %v184
  %v188 = vmax.f32 %v186, 0.0
  %v189 = vmax.f32 %v187, 0.0
  %vm190 = vcmask 130048
  %v192 = vsel %vm190, %v188, 0
  %v195 = vsel %vm190, %v189, 0
  %v198 = vsel %vm190, %v158, 0
  %v201 = vsel %vm190, %v159, 0
  %v204 = vsel %vm190, %v160, 0
  %v207 = vsel %vm190, %v161, 0
  %v210 = vsel %vm190, %v162, 0
  %v213 = vsel %vm190, %v163, 0
  %v216 = vsel %vm190, %v164, 0
  %v219 = vsel %vm190, %v165, 0
  %v222 = vsel %vm190, %v166, 0
  %v225 = vsel %vm190, %v167, 0
  %v228 = vsel %vm190, %v168, 0
  %v231 = vsel %vm190, %v169, 0
  %v234 = vsel %vm190, %v170, 0
  %v237 = vsel %vm190, %v171, 0
  %v240 = vsel %vm190, %v172, 0
  %v243 = vsel %vm190, %v173, 0
  %245 = vmatpush.xpose.msra.mxu0 %v243
  %246 = vmatpush.xpose.msra.mxu0 %v240
  %247 = vmatpush.xpose.msra.mxu0 %v237
  %248 = vmatpush.xpose.msra.mxu0 %v234
  %249 = vmatpush.xpose.msra.mxu0 %v231
  %250 = vmatpush.xpose.msra.mxu0 %v228
  %251 = vmatpush.xpose.msra.mxu0 %v225
  %252 = vmatpush.xpose.msra.mxu0 %v222
  %253 = vmatpush.xpose.msra.mxu0 %v219
  %254 = vmatpush.xpose.msra.mxu0 %v216
  %255 = vmatpush.xpose.msra.mxu0 %v213
  %256 = vmatpush.xpose.msra.mxu0 %v210
  %257 = vmatpush.xpose.msra.mxu0 %v207
  %258 = vmatpush.xpose.msra.mxu0 %v204
  %259 = vmatpush.xpose.msra.mxu0 %v201
  %260 = vmatpush.xpose.msra.mxu0 %v198
  %261 = vmatmul.f32.gmra.mxu0 %v192
  %v262 = vpop.f32.mrf.mxu0
  %v263 = vadd.f32 0.0, %v262
  %264 = vmatmul.f32.gmra.mxu0 %v195
  %v265 = vpop.f32.mrf.mxu0
  %v266 = vadd.f32 0.0, %v265
  %267 = vdwg.mxu0
  %v268 = vxor.u32 %v263, 2147483648
  %v269 = vxor.u32 %v266, 2147483648
  %v270 = vmul.f32 %v268, 1.442695
  %v271 = vpow.pop %v270
  %v272 = vmul.f32 %v269, 1.442695
  %v273 = vpow.pop %v272
  %v274 = vadd.f32 %v271, 1.0
  %v275 = vadd.f32 %v273, 1.0
  %v276 = vrcp.pop %v274
  %v277 = vmul.f32 %v274, %v276
  %v278 = vsub.f32 1.0, %v277
  %v279 = vmul.f32 %v276, %v278
  %v280 = vadd.f32 %v276, %v279
  %vm281 = vweird.f32 %v274
  %vm282 = vweird.f32 %v276
  %vm283 = vmor %vm281, %vm282
  %v284 = vsel %vm283, %v276, %v280
  %v285 = vand.u32 2147483647, %v274
  %vm286 = vcmp.eq.f32.partialorder %v285, 8.507059e+37
  %v287 = vand.u32 %v274, 2147483648
  %v288 = vor.u32 1.1754944e-38, %v287
  %v289 = vsel %vm286, %v288, %v284
  %v290 = vmul.f32 1.0, %v289
  %v291 = vrcp.pop %v275
  %v292 = vmul.f32 %v275, %v291
  %v293 = vsub.f32 1.0, %v292
  %v294 = vmul.f32 %v291, %v293
  %v295 = vadd.f32 %v291, %v294
  %vm296 = vweird.f32 %v275
  %vm297 = vweird.f32 %v291
  %vm298 = vmor %vm296, %vm297
  %v299 = vsel %vm298, %v291, %v295
  %v300 = vand.u32 2147483647, %v275
  %vm301 = vcmp.eq.f32.partialorder %v300, 8.507059e+37
  %v302 = vand.u32 %v275, 2147483648
  %v303 = vor.u32 1.1754944e-38, %v302
  %v304 = vsel %vm301, %v303, %v299
  %v305 = vmul.f32 1.0, %v304
  %v306 = vmul.f32 %v153, %v290
  %v307 = vmul.f32 %v155, %v305
  %308 = vst [vmem:[%s5] sm:$0xff] %v306
  %309 = vst [vmem:[%s5 + $0x10] sm:$0xff] %v307
  %v310 = vsel %vm174, %v154, 0.0
  %311 = vadd.xlane.f32.xlu0 %v310
  %v312 = vpop.xlane.xlu0 %311
  %v313 = vsel %vm174, %v156, 0.0
  %314 = vadd.xlane.f32.xlu0 %v313
  %v315 = vpop.xlane.xlu0 %314
  %v316 = vmul.f32 %v312, 0.010638298
  %v317 = vmul.f32 %v315, 0.010638298
  %v318 = vmul.f32 %v316, %v184
  %v319 = vmul.f32 %v317, %v184
  %v320 = vmax.f32 %v318, 0.0
  %v321 = vmax.f32 %v319, 0.0
  %v323 = vsel %vm190, %v320, 0
  %v326 = vsel %vm190, %v321, 0
  %328 = vmatpush.xpose.msra.mxu0 %v243
  %329 = vmatpush.xpose.msra.mxu0 %v240
  %330 = vmatpush.xpose.msra.mxu0 %v237
  %331 = vmatpush.xpose.msra.mxu0 %v234
  %332 = vmatpush.xpose.msra.mxu0 %v231
  %333 = vmatpush.xpose.msra.mxu0 %v228
  %334 = vmatpush.xpose.msra.mxu0 %v225
  %335 = vmatpush.xpose.msra.mxu0 %v222
  %336 = vmatpush.xpose.msra.mxu0 %v219
  %337 = vmatpush.xpose.msra.mxu0 %v216
  %338 = vmatpush.xpose.msra.mxu0 %v213
  %339 = vmatpush.xpose.msra.mxu0 %v210
  %340 = vmatpush.xpose.msra.mxu0 %v207
  %341 = vmatpush.xpose.msra.mxu0 %v204
  %342 = vmatpush.xpose.msra.mxu0 %v201
  %343 = vmatpush.xpose.msra.mxu0 %v198
  %344 = vmatmul.f32.gmra.mxu0 %v323
  %v345 = vpop.f32.mrf.mxu0
  %v346 = vadd.f32 0.0, %v345
  %347 = vmatmul.f32.gmra.mxu0 %v326
  %v348 = vpop.f32.mrf.mxu0
  %v349 = vadd.f32 0.0, %v348
  %350 = vdwg.mxu0
  %v351 = vxor.u32 %v346, 2147483648
  %v352 = vxor.u32 %v349, 2147483648
  %v353 = vmul.f32 %v351, 1.442695
  %v354 = vpow.pop %v353
  %v355 = vmul.f32 %v352, 1.442695
  %v356 = vpow.pop %v355
  %v357 = vadd.f32 %v354, 1.0
  %v358 = vadd.f32 %v356, 1.0
  %v359 = vrcp.pop %v357
  %v360 = vmul.f32 %v357, %v359
  %v361 = vsub.f32 1.0, %v360
  %v362 = vmul.f32 %v359, %v361
  %v363 = vadd.f32 %v359, %v362
  %vm364 = vweird.f32 %v357
  %vm365 = vweird.f32 %v359
  %vm366 = vmor %vm364, %vm365
  %v367 = vsel %vm366, %v359, %v363
  %v368 = vand.u32 2147483647, %v357
  %vm369 = vcmp.eq.f32.partialorder %v368, 8.507059e+37
  %v370 = vand.u32 %v357, 2147483648
  %v371 = vor.u32 1.1754944e-38, %v370
  %v372 = vsel %vm369, %v371, %v367
  %v373 = vmul.f32 1.0, %v372
  %v374 = vrcp.pop %v358
  %v375 = vmul.f32 %v358, %v374
  %v376 = vsub.f32 1.0, %v375
  %v377 = vmul.f32 %v374, %v376
  %v378 = vadd.f32 %v374, %v377
  %vm379 = vweird.f32 %v358
  %vm380 = vweird.f32 %v374
  %vm381 = vmor %vm379, %vm380
  %v382 = vsel %vm381, %v374, %v378
  %v383 = vand.u32 2147483647, %v358
  %vm384 = vcmp.eq.f32.partialorder %v383, 8.507059e+37
  %v385 = vand.u32 %v358, 2147483648
  %v386 = vor.u32 1.1754944e-38, %v385
  %v387 = vsel %vm384, %v386, %v382
  %v388 = vmul.f32 1.0, %v387
  %v389 = vmul.f32 %v154, %v373
  %v390 = vmul.f32 %v156, %v388
  %391 = vst [vmem:[%s5 + $0x8] sm:$0xff] %v389
  %392 = vst [vmem:[%s5 + $0x18] sm:$0xff] %v390
  // Predicated region
  $region22: #{multi_scale_conv_layer.1} parent=0 // pred_check
    _
  $region23: #{multi_scale_conv_layer.1} parent=0 // pred_check_branch
    %394 = sbr.rel (0) target = $region25
  $region24: #{multi_scale_conv_layer.1} parent=0 // pred_region
    _
  $region25: #{multi_scale_conv_layer.1} parent=0 // pred_fallthru
    _
  // Predicated region
  $region26: #{multi_scale_conv_layer.1} parent=0 // pred_check
    _
  $region27: #{multi_scale_conv_layer.1} parent=0 // pred_check_branch
    %396 = sbr.rel (0) target = $region29
  $region28: #{multi_scale_conv_layer.1} parent=0 // pred_region
    _
  $region29: #{multi_scale_conv_layer.1} parent=0 // pred_fallthru
    _

</llo_original>
